<compile_context>
chip_gen: v5e
topology: v5e:2x2
jax: 0.10.0
libtpu: 0.0.40
codegen_flags: <defaults>
</compile_context>

<pallas_src>
import functools

import jax
import jax.numpy as jnp
from jax.experimental import pallas as pl
from jax.experimental.pallas import tpu as pltpu

NUM_CLASSES = 7
D_IN = 512
D_H1 = 512
D_H2 = 256
N_PAD = 128  # lane-dense padded width for the final output (>= NUM_CLASSES)


def _round_up(x, m):
    return (x + m - 1) // m * m


def emotion_branch_kernel(x_ref, w1_ref, w2_ref, w3_ref, o_ref):
    # x_ref : (tb, 512)  f32  (cast to bf16 in-kernel; no wrapper cast op)
    # w1_ref: (512, 512) bf16   w2_ref: (512, 256) bf16   w3_ref: (256, 128) bf16
    # o_ref : (tb, 128)  bf16  (lane-dense padded; sliced in the wrapper)
    x = x_ref[...].astype(jnp.bfloat16)
    h1 = jnp.dot(x, w1_ref[...], preferred_element_type=jnp.float32)
    h1 = jnp.maximum(h1, 0.0).astype(jnp.bfloat16)            # emrelu1
    h2 = jnp.dot(h1, w2_ref[...], preferred_element_type=jnp.float32)
    h2 = jnp.maximum(h2, 0.0).astype(jnp.bfloat16)            # emrelu2
    out = jnp.dot(h2, w3_ref[...], preferred_element_type=jnp.float32)
    o_ref[...] = out.astype(o_ref.dtype)


def prepare_emotion_branch_weights(w1, w2, w3):
    """One-time weight preparation (keep OUT of the per-call hot path).

    Takes PyTorch nn.Linear (out, in) weights, returns (in, out) bf16 operands
    with the final layer zero-padded on the lane axis from NUM_CLASSES to N_PAD.
    """
    w1_t = jnp.asarray(w1.T, dtype=jnp.bfloat16)                      # (512, 512)
    w2_t = jnp.asarray(w2.T, dtype=jnp.bfloat16)                      # (512, 256)
    w3_t = jnp.zeros((D_H2, N_PAD), dtype=jnp.bfloat16)
    w3_t = w3_t.at[:, :NUM_CLASSES].set(jnp.asarray(w3.T, dtype=jnp.bfloat16))
    return w1_t, w2_t, w3_t


def _pick_batch_tile(b8, tb_max):
    """Large enough to amortize the ~0.35us per-grid-step overhead, but split so
    mid/large batches keep >= 2 'parallel' grid steps (v7x has 2 TensorCores)."""
    if b8 <= 256:
        return b8                                   # one step; too small to split
    tb = min(tb_max, _round_up(pl.cdiv(b8, 2), 256))
    return max(tb, 256)


@functools.partial(jax.jit, static_argnames=("tb_max",))
def emotion_branch(x, w1_t, w2_t, w3_t, *, tb_max=512):
    """x: (B, 512) f32.  w*_t: outputs of prepare_emotion_branch_weights."""
    B = x.shape[0]
    # Only a tiny sublane-alignment pad when B is not a multiple of 8; the batch
    # tile boundary itself is handled by the pl.cdiv grid (edge-block masking).
    B8 = _round_up(max(B, 8), 8)
    xp = x if B8 == B else jnp.pad(x, ((0, B8 - B), (0, 0)))

    tb = _pick_batch_tile(B8, tb_max)
    grid = (pl.cdiv(B8, tb),)

    out = pl.pallas_call(
        emotion_branch_kernel,
        out_shape=jax.ShapeDtypeStruct((B8, N_PAD), jnp.bfloat16),
        grid_spec=pltpu.PrefetchScalarGridSpec(
            num_scalar_prefetch=0,
            grid=grid,
            in_specs=[
                pl.BlockSpec((tb, D_IN), lambda i: (i, 0)),
                # Constant index maps + single buffer: weights DMA'd once,
                # VMEM-resident across all batch grid steps.
                pl.BlockSpec((D_IN, D_H1), lambda i: (0, 0),
                             pipeline_mode=pl.Buffered(1)),
                pl.BlockSpec((D_H1, D_H2), lambda i: (0, 0),
                             pipeline_mode=pl.Buffered(1)),
                pl.BlockSpec((D_H2, N_PAD), lambda i: (0, 0),
                             pipeline_mode=pl.Buffered(1)),
            ],
            out_specs=pl.BlockSpec((tb, N_PAD), lambda i: (i, 0)),
        ),
        compiler_params=pltpu.CompilerParams(
            dimension_semantics=("parallel",),
        ),
    )(xp, w1_t, w2_t, w3_t)
    # Drop alignment padding and the lane padding of the final layer; restore
    # the caller's dtype (tiny op, fuses with the slice).
    return out[:B, :NUM_CLASSES].astype(x.dtype)


def reference(x, w1, w2, w3):
    h1 = jnp.maximum(x @ w1.T, 0.0)
    h2 = jnp.maximum(h1 @ w2.T, 0.0)
    return h2 @ w3.T


if __name__ == "__main__":
    key = jax.random.PRNGKey(0)
    kx, k1, k2, k3 = jax.random.split(key, 4)

    B = 16
    x = jax.random.normal(kx, (B, D_IN), dtype=jnp.float32)
    # Deterministic synthetic weights in PyTorch nn.Linear layout (out, in).
    w1 = jax.random.normal(k1, (D_H1, D_IN), dtype=jnp.float32) * 0.02
    w2 = jax.random.normal(k2, (D_H2, D_H1), dtype=jnp.float32) * 0.02
    w3 = jax.random.normal(k3, (NUM_CLASSES, D_H2), dtype=jnp.float32) * 0.02

    # Weight prep happens once, outside the hot path.
    w1_t, w2_t, w3_t = prepare_emotion_branch_weights(w1, w2, w3)

    out = emotion_branch(x, w1_t, w2_t, w3_t)
    out = jax.block_until_ready(out)

    ref = reference(x, w1, w2, w3)
    assert out.shape == (B, NUM_CLASSES)
    # bf16 operands + bf16 output store vs f32 reference -> loosened tolerance.
    max_err = float(jnp.max(jnp.abs(out - ref)))
    assert jnp.allclose(out, ref, atol=3e-2, rtol=3e-2), (
        f"mismatch vs f32 reference (max abs err {max_err})"
    )

    print("KERNEL_OK")
</pallas_src>

<mosaic_0001>
module attributes {stable_mosaic.version = 11 : i64} {
  func.func @emotion_branch_kernel(%arg0: i32, %arg1: memref<16x512xf32, #tpu.memory_space<vmem>>, %arg2: memref<512x512xbf16, #tpu.memory_space<vmem>>, %arg3: memref<512x256xbf16, #tpu.memory_space<vmem>>, %arg4: memref<256x128xbf16, #tpu.memory_space<vmem>>, %arg5: memref<16x128xbf16, #tpu.memory_space<vmem>>) attributes {dimension_semantics = [#tpu.dimension_semantics<parallel>], iteration_bounds = array<i64: 1>, scalar_prefetch = 0 : i64, scratch_operands = 0 : i64, tpu.core_type = #tpu.core_type<tc>, window_params = [{transform_indices = @transform_0, window_bounds = array<i64: 16, 512>}, {pipeline_mode = #tpu.pipeline_mode<synchronous>, transform_indices = @transform_1, window_bounds = array<i64: 512, 512>}, {pipeline_mode = #tpu.pipeline_mode<synchronous>, transform_indices = @transform_2, window_bounds = array<i64: 512, 256>}, {pipeline_mode = #tpu.pipeline_mode<synchronous>, transform_indices = @transform_3, window_bounds = array<i64: 256, 128>}, {transform_indices = @transform_4, window_bounds = array<i64: 16, 128>}]} {
    %c0 = arith.constant 0 : index
    %c0_0 = arith.constant 0 : index
    %0 = vector.load %arg1[%c0, %c0_0] : memref<16x512xf32, #tpu.memory_space<vmem>>, vector<16x512xf32>
    %1 = arith.truncf %0 : vector<16x512xf32> to vector<16x512xbf16>
    %c0_1 = arith.constant 0 : index
    %c0_2 = arith.constant 0 : index
    %2 = vector.load %arg2[%c0_1, %c0_2] : memref<512x512xbf16, #tpu.memory_space<vmem>>, vector<512x512xbf16>
    %cst = arith.constant dense<0.000000e+00> : vector<16x512xf32>
    %3 = tpu.matmul %1, %2, %cst {dimension_numbers = #tpu.dot_dimension_numbers<[1], [0], [0], [1], [0, 0, 1, 1], [], []>} : vector<16x512xbf16>, vector<512x512xbf16>, vector<16x512xf32> -> vector<16x512xf32>
    %cst_3 = arith.constant 0.000000e+00 : f32
    %4 = vector.broadcast %cst_3 : f32 to vector<16x512xf32>
    %5 = arith.maximumf %3, %4 : vector<16x512xf32>
    %6 = arith.truncf %5 : vector<16x512xf32> to vector<16x512xbf16>
    %c0_4 = arith.constant 0 : index
    %c0_5 = arith.constant 0 : index
    %7 = vector.load %arg3[%c0_4, %c0_5] : memref<512x256xbf16, #tpu.memory_space<vmem>>, vector<512x256xbf16>
    %cst_6 = arith.constant dense<0.000000e+00> : vector<16x256xf32>
    %8 = tpu.matmul %6, %7, %cst_6 {dimension_numbers = #tpu.dot_dimension_numbers<[1], [0], [0], [1], [0, 0, 1, 1], [], []>} : vector<16x512xbf16>, vector<512x256xbf16>, vector<16x256xf32> -> vector<16x256xf32>
    %cst_7 = arith.constant 0.000000e+00 : f32
    %9 = vector.broadcast %cst_7 : f32 to vector<16x256xf32>
    %10 = arith.maximumf %8, %9 : vector<16x256xf32>
    %11 = arith.truncf %10 : vector<16x256xf32> to vector<16x256xbf16>
    %c0_8 = arith.constant 0 : index
    %c0_9 = arith.constant 0 : index
    %12 = vector.load %arg4[%c0_8, %c0_9] : memref<256x128xbf16, #tpu.memory_space<vmem>>, vector<256x128xbf16>
    %cst_10 = arith.constant dense<0.000000e+00> : vector<16x128xf32>
    %13 = tpu.matmul %11, %12, %cst_10 {dimension_numbers = #tpu.dot_dimension_numbers<[1], [0], [0], [1], [0, 0, 1, 1], [], []>} : vector<16x256xbf16>, vector<256x128xbf16>, vector<16x128xf32> -> vector<16x128xf32>
    %14 = arith.truncf %13 : vector<16x128xf32> to vector<16x128xbf16>
    %c0_11 = arith.constant 0 : index
    %c0_12 = arith.constant 0 : index
    %15 = vector.load %arg5[%c0_11, %c0_12] : memref<16x128xbf16, #tpu.memory_space<vmem>>, vector<16x128xbf16>
    tpu.vector_store %arg5[%c0_11, %c0_12], %14 {strides = array<i32>} : memref<16x128xbf16, #tpu.memory_space<vmem>>, vector<16x128xbf16>,
    return
  }
  func.func @transform_0(%arg0: i32) -> (i32, i32) {
    %c0_i32 = arith.constant 0 : i32
    %c0_i32_0 = arith.constant 0 : i32
    return %arg0, %c0_i32 : i32, i32
  }
  func.func @transform_1(%arg0: i32) -> (i32, i32) {
    %c0_i32 = arith.constant 0 : i32
    %c0_i32_0 = arith.constant 0 : i32
    %c0_i32_1 = arith.constant 0 : i32
    return %c0_i32, %c0_i32_0 : i32, i32
  }
  func.func @transform_2(%arg0: i32) -> (i32, i32) {
    %c0_i32 = arith.constant 0 : i32
    %c0_i32_0 = arith.constant 0 : i32
    %c0_i32_1 = arith.constant 0 : i32
    return %c0_i32, %c0_i32_0 : i32, i32
  }
  func.func @transform_3(%arg0: i32) -> (i32, i32) {
    %c0_i32 = arith.constant 0 : i32
    %c0_i32_0 = arith.constant 0 : i32
    %c0_i32_1 = arith.constant 0 : i32
    return %c0_i32, %c0_i32_0 : i32, i32
  }
  func.func @transform_4(%arg0: i32) -> (i32, i32) {
    %c0_i32 = arith.constant 0 : i32
    %c0_i32_0 = arith.constant 0 : i32
    return %arg0, %c0_i32 : i32, i32
  }
}

</mosaic_0001>

<llo_original>
// kernel: emotion_branch.1
$region0: #{emotion_branch.1}
  #allocation0 [shape = 'u32[]', space=smem, size = 0x4, offset = 0x4, fixed_abs, tag = 'smem constant byte address 0x4 - core index']
  #allocation1 [shape = 'u32[72,128]{1,0:T(1,128)}', space=vmem, size = 0x9000, scoped, tag = 'internal scratch']
  %s0 = inlined_call_operand.hbm [shape: f32[16,512], index: 0, kind: input, shape index: {}]
  %s1 = inlined_call_operand.hbm [shape: bf16[512,512], index: 1, kind: input, shape index: {}]
  %s2 = inlined_call_operand.hbm [shape: bf16[512,256], index: 2, kind: input, shape index: {}]
  %s3 = inlined_call_operand.hbm [shape: bf16[256,128], index: 3, kind: input, shape index: {}]
  %s4 = inlined_call_operand.vmem [shape: bf16[16,128], index: 4, kind: output, shape index: {}]
  %s5 = sld [smem:[#allocation0]]
  $region42: #{emotion_branch.1} parent=0
    _
  %s7 = ssub.s32 1, %s5
  %s8 = scalar_select 0, %s7, %s5
  $region1: #{emotion_branch.1} parent=0
    #allocation2 [shape = 'u8[32768]{0}', space=vmem, size = 0x8000, scoped, tag = 'input window, operand 0, single buffered']
    #allocation3 [shape = 's32[1]{0}', space=sflag, size = 0x4, scoped, tag = 'scoped memory for emotion_branch.1']
    #allocation4 [shape = 'u8[524288]{0}', space=vmem, size = 0x80000, scoped, tag = 'input window, operand 1, single buffered']
    #allocation5 [shape = 's32[1]{0}', space=sflag, size = 0x4, scoped, tag = 'scoped memory for emotion_branch.1']
    #allocation6 [shape = 'u8[262144]{0}', space=vmem, size = 0x40000, scoped, tag = 'input window, operand 2, single buffered']
    #allocation7 [shape = 'u8[65536]{0}', space=vmem, size = 0x10000, scoped, tag = 'input window, operand 3, single buffered']
    #allocation8 [shape = 's32[1]{0}', space=sflag, size = 0x4, scoped, tag = 'scoped memory for emotion_branch.1']
    %9 = vsyncpa [#allocation3], 0
    %10 = vsyncpa [#allocation5], 0
    %11 = vsyncpa [#allocation8], 0
    // Predicated region
    $region2: #{emotion_branch.1} parent=1 // pred_check
      _
    $region3: #{emotion_branch.1} parent=1 // pred_check_branch
      %13 = sbr.rel (0) target = $region5
    $region4: #{emotion_branch.1} parent=1 // pred_region
      %15 = vsyncadd [#allocation3], 0
      %s16 = sshll.u32 %s0, 4
      %s17 = int_to_ptr.hbm [resolvable:$true] %s16
      %s18 = sshll.u32 [#allocation2], 4
      %s19 = int_to_ptr.vmem [resolvable:$true] %s18
      %24 = dma.hbm_to_vmem [thread:$0]  %s17, 1024, %s19, [#allocation3], 512, 512, 32
    $region5: #{emotion_branch.1} parent=1 // pred_fallthru
      _
    // Predicated region
    $region6: #{emotion_branch.1} parent=1 // pred_check
      _
    $region7: #{emotion_branch.1} parent=1 // pred_check_branch
      %26 = sbr.rel (0) target = $region9
    $region8: #{emotion_branch.1} parent=1 // pred_region
      %28 = vsyncadd [#allocation5], 0
      %s29 = sshll.u32 %s1, 4
      %s30 = int_to_ptr.hbm [resolvable:$true] %s29
      %s31 = sshll.u32 [#allocation4], 4
      %s32 = int_to_ptr.vmem [resolvable:$true] %s31
      %37 = dma.hbm_to_vmem [thread:$0]  %s30, 16384, %s32, [#allocation5], 256, 256, 16
    $region9: #{emotion_branch.1} parent=1 // pred_fallthru
      _
    // Predicated region
    $region10: #{emotion_branch.1} parent=1 // pred_check
      _
    $region11: #{emotion_branch.1} parent=1 // pred_check_branch
      %39 = sbr.rel (0) target = $region13
    $region12: #{emotion_branch.1} parent=1 // pred_region
      %41 = vsyncadd [#allocation5], 0
      %s42 = sshll.u32 %s2, 4
      %s43 = int_to_ptr.hbm [resolvable:$true] %s42
      %s44 = sshll.u32 [#allocation6], 4
      %s45 = int_to_ptr.vmem [resolvable:$true] %s44
      %50 = dma.hbm_to_vmem [thread:$0]  %s43, 8192, %s45, [#allocation5], 128, 128, 8
    $region13: #{emotion_branch.1} parent=1 // pred_fallthru
      _
    // Predicated region
    $region14: #{emotion_branch.1} parent=1 // pred_check
      _
    $region15: #{emotion_branch.1} parent=1 // pred_check_branch
      %52 = sbr.rel (0) target = $region17
    $region16: #{emotion_branch.1} parent=1 // pred_region
      %54 = vsyncadd [#allocation8], 0
      %s55 = sshll.u32 %s3, 4
      %s56 = int_to_ptr.hbm [resolvable:$true] %s55
      %s57 = sshll.u32 [#allocation7], 4
      %s58 = int_to_ptr.vmem [resolvable:$true] %s57
      %63 = dma.hbm_to_vmem [thread:$0]  %s56, 2048, %s58, [#allocation8], 64, 64, 4
    $region17: #{emotion_branch.1} parent=1 // pred_fallthru
      _
    // Predicated region
    $region18: #{emotion_branch.1} parent=1 // pred_check
      _
    $region19: #{emotion_branch.1} parent=1 // pred_check_branch
      %65 = sbr.rel (0) target = $region21
    $region20: #{emotion_branch.1} parent=1 // pred_region
      %67 = dma.done [#allocation3], 1024
    $region21: #{emotion_branch.1} parent=1 // pred_fallthru
      _
    // Predicated region
    $region22: #{emotion_branch.1} parent=1 // pred_check
      _
    $region23: #{emotion_branch.1} parent=1 // pred_check_branch
      %69 = sbr.rel (0) target = $region25
    $region24: #{emotion_branch.1} parent=1 // pred_region
      %71 = dma.done [#allocation5], 16384
    $region25: #{emotion_branch.1} parent=1 // pred_fallthru
      _
    // Predicated region
    $region26: #{emotion_branch.1} parent=1 // pred_check
      _
    $region27: #{emotion_branch.1} parent=1 // pred_check_branch
      %73 = sbr.rel (0) target = $region29
    $region28: #{emotion_branch.1} parent=1 // pred_region
      %75 = dma.done [#allocation5], 8192
    $region29: #{emotion_branch.1} parent=1 // pred_fallthru
      _
    // Predicated region
    $region30: #{emotion_branch.1} parent=1 // pred_check
      _
    $region31: #{emotion_branch.1} parent=1 // pred_check_branch
      %77 = sbr.rel (0) target = $region33
    $region32: #{emotion_branch.1} parent=1 // pred_region
      %79 = dma.done [#allocation8], 2048
    $region33: #{emotion_branch.1} parent=1 // pred_fallthru
      _
    %v80 = vld [vmem:[#allocation2] sm:$0xff]
    %v81 = vld [vmem:[#allocation2 + $0x8] sm:$0xff]
    %v82 = vld [vmem:[#allocation2 + $0x10] sm:$0xff]
    %v83 = vld [vmem:[#allocation2 + $0x18] sm:$0xff]
    %v84 = vld [vmem:[#allocation2 + $0x20] sm:$0xff]
    %v85 = vld [vmem:[#allocation2 + $0x28] sm:$0xff]
    %v86 = vld [vmem:[#allocation2 + $0x30] sm:$0xff]
    %v87 = vld [vmem:[#allocation2 + $0x38] sm:$0xff]
    %v88 = vpack.c.bf16 %v84, %v80
    %v89 = vpack.c.bf16 %v85, %v81
    %v90 = vpack.c.bf16 %v86, %v82
    %v91 = vpack.c.bf16 %v87, %v83
    %v92 = vld [vmem:[#allocation4] sm:$0xff]
    %v93 = vld [vmem:[#allocation4 + $0x8] sm:$0xff]
    %v94 = vld [vmem:[#allocation4 + $0x10] sm:$0xff]
    %v95 = vld [vmem:[#allocation4 + $0x18] sm:$0xff]
    %v96 = vld [vmem:[#allocation4 + $0x20] sm:$0xff]
    %v97 = vld [vmem:[#allocation4 + $0x28] sm:$0xff]
    %v98 = vld [vmem:[#allocation4 + $0x30] sm:$0xff]
    %v99 = vld [vmem:[#allocation4 + $0x38] sm:$0xff]
    %v100 = vld [vmem:[#allocation4 + $0x40] sm:$0xff]
    %v101 = vld [vmem:[#allocation4 + $0x48] sm:$0xff]
    %v102 = vld [vmem:[#allocation4 + $0x50] sm:$0xff]
    %v103 = vld [vmem:[#allocation4 + $0x58] sm:$0xff]
    %v104 = vld [vmem:[#allocation4 + $0x60] sm:$0xff]
    %v105 = vld [vmem:[#allocation4 + $0x68] sm:$0xff]
    %v106 = vld [vmem:[#allocation4 + $0x70] sm:$0xff]
    %v107 = vld [vmem:[#allocation4 + $0x78] sm:$0xff]
    %v108 = vld [vmem:[#allocation4 + $0x80] sm:$0xff]
    %v109 = vld [vmem:[#allocation4 + $0x88] sm:$0xff]
    %v110 = vld [vmem:[#allocation4 + $0x90] sm:$0xff]
    %v111 = vld [vmem:[#allocation4 + $0x98] sm:$0xff]
    %v112 = vld [vmem:[#allocation4 + $0xa0] sm:$0xff]
    %v113 = vld [vmem:[#allocation4 + $0xa8] sm:$0xff]
    %v114 = vld [vmem:[#allocation4 + $0xb0] sm:$0xff]
    %v115 = vld [vmem:[#allocation4 + $0xb8] sm:$0xff]
    %v116 = vld [vmem:[#allocation4 + $0xc0] sm:$0xff]
    %v117 = vld [vmem:[#allocation4 + $0xc8] sm:$0xff]
    %v118 = vld [vmem:[#allocation4 + $0xd0] sm:$0xff]
    %v119 = vld [vmem:[#allocation4 + $0xd8] sm:$0xff]
    %v120 = vld [vmem:[#allocation4 + $0xe0] sm:$0xff]
    %v121 = vld [vmem:[#allocation4 + $0xe8] sm:$0xff]
    %v122 = vld [vmem:[#allocation4 + $0xf0] sm:$0xff]
    %v123 = vld [vmem:[#allocation4 + $0xf8] sm:$0xff]
    %v124 = vld [vmem:[#allocation4 + $0x100] sm:$0xff]
    %v125 = vld [vmem:[#allocation4 + $0x108] sm:$0xff]
    %v126 = vld [vmem:[#allocation4 + $0x110] sm:$0xff]
    %v127 = vld [vmem:[#allocation4 + $0x118] sm:$0xff]
    %v128 = vld [vmem:[#allocation4 + $0x120] sm:$0xff]
    %v129 = vld [vmem:[#allocation4 + $0x128] sm:$0xff]
    %v130 = vld [vmem:[#allocation4 + $0x130] sm:$0xff]
    %v131 = vld [vmem:[#allocation4 + $0x138] sm:$0xff]
    %v132 = vld [vmem:[#allocation4 + $0x140] sm:$0xff]
    %v133 = vld [vmem:[#allocation4 + $0x148] sm:$0xff]
    %v134 = vld [vmem:[#allocation4 + $0x150] sm:$0xff]
    %v135 = vld [vmem:[#allocation4 + $0x158] sm:$0xff]
    %v136 = vld [vmem:[#allocation4 + $0x160] sm:$0xff]
    %v137 = vld [vmem:[#allocation4 + $0x168] sm:$0xff]
    %v138 = vld [vmem:[#allocation4 + $0x170] sm:$0xff]
    %v139 = vld [vmem:[#allocation4 + $0x178] sm:$0xff]
    %v140 = vld [vmem:[#allocation4 + $0x180] sm:$0xff]
    %v141 = vld [vmem:[#allocation4 + $0x188] sm:$0xff]
    %v142 = vld [vmem:[#allocation4 + $0x190] sm:$0xff]
    %v143 = vld [vmem:[#allocation4 + $0x198] sm:$0xff]
    %v144 = vld [vmem:[#allocation4 + $0x1a0] sm:$0xff]
    %v145 = vld [vmem:[#allocation4 + $0x1a8] sm:$0xff]
    %v146 = vld [vmem:[#allocation4 + $0x1b0] sm:$0xff]
    %v147 = vld [vmem:[#allocation4 + $0x1b8] sm:$0xff]
    %v148 = vld [vmem:[#allocation4 + $0x1c0] sm:$0xff]
    %v149 = vld [vmem:[#allocation4 + $0x1c8] sm:$0xff]
    %v150 = vld [vmem:[#allocation4 + $0x1d0] sm:$0xff]
    %v151 = vld [vmem:[#allocation4 + $0x1d8] sm:$0xff]
    %v152 = vld [vmem:[#allocation4 + $0x1e0] sm:$0xff]
    %v153 = vld [vmem:[#allocation4 + $0x1e8] sm:$0xff]
    %v154 = vld [vmem:[#allocation4 + $0x1f0] sm:$0xff]
    %v155 = vld [vmem:[#allocation4 + $0x1f8] sm:$0xff]
    %v156 = vld [vmem:[#allocation4 + $0x200] sm:$0xff]
    %v157 = vld [vmem:[#allocation4 + $0x208] sm:$0xff]
    %v158 = vld [vmem:[#allocation4 + $0x210] sm:$0xff]
    %v159 = vld [vmem:[#allocation4 + $0x218] sm:$0xff]
    %v160 = vld [vmem:[#allocation4 + $0x220] sm:$0xff]
    %v161 = vld [vmem:[#allocation4 + $0x228] sm:$0xff]
    %v162 = vld [vmem:[#allocation4 + $0x230] sm:$0xff]
    %v163 = vld [vmem:[#allocation4 + $0x238] sm:$0xff]
    %v164 = vld [vmem:[#allocation4 + $0x240] sm:$0xff]
    %v165 = vld [vmem:[#allocation4 + $0x248] sm:$0xff]
    %v166 = vld [vmem:[#allocation4 + $0x250] sm:$0xff]
    %v167 = vld [vmem:[#allocation4 + $0x258] sm:$0xff]
    %v168 = vld [vmem:[#allocation4 + $0x260] sm:$0xff]
    %v169 = vld [vmem:[#allocation4 + $0x268] sm:$0xff]
    %v170 = vld [vmem:[#allocation4 + $0x270] sm:$0xff]
    %v171 = vld [vmem:[#allocation4 + $0x278] sm:$0xff]
    %v172 = vld [vmem:[#allocation4 + $0x280] sm:$0xff]
    %v173 = vld [vmem:[#allocation4 + $0x288] sm:$0xff]
    %v174 = vld [vmem:[#allocation4 + $0x290] sm:$0xff]
    %v175 = vld [vmem:[#allocation4 + $0x298] sm:$0xff]
    %v176 = vld [vmem:[#allocation4 + $0x2a0] sm:$0xff]
    %v177 = vld [vmem:[#allocation4 + $0x2a8] sm:$0xff]
    %v178 = vld [vmem:[#allocation4 + $0x2b0] sm:$0xff]
    %v179 = vld [vmem:[#allocation4 + $0x2b8] sm:$0xff]
    %v180 = vld [vmem:[#allocation4 + $0x2c0] sm:$0xff]
    %v181 = vld [vmem:[#allocation4 + $0x2c8] sm:$0xff]
    %v182 = vld [vmem:[#allocation4 + $0x2d0] sm:$0xff]
    %v183 = vld [vmem:[#allocation4 + $0x2d8] sm:$0xff]
    %v184 = vld [vmem:[#allocation4 + $0x2e0] sm:$0xff]
    %v185 = vld [vmem:[#allocation4 + $0x2e8] sm:$0xff]
    %v186 = vld [vmem:[#allocation4 + $0x2f0] sm:$0xff]
    %v187 = vld [vmem:[#allocation4 + $0x2f8] sm:$0xff]
    %v188 = vld [vmem:[#allocation4 + $0x300] sm:$0xff]
    %v189 = vld [vmem:[#allocation4 + $0x308] sm:$0xff]
    %v190 = vld [vmem:[#allocation4 + $0x310] sm:$0xff]
    %v191 = vld [vmem:[#allocation4 + $0x318] sm:$0xff]
    %v192 = vld [vmem:[#allocation4 + $0x320] sm:$0xff]
    %v193 = vld [vmem:[#allocation4 + $0x328] sm:$0xff]
    %v194 = vld [vmem:[#allocation4 + $0x330] sm:$0xff]
    %v195 = vld [vmem:[#allocation4 + $0x338] sm:$0xff]
    %v196 = vld [vmem:[#allocation4 + $0x340] sm:$0xff]
    %v197 = vld [vmem:[#allocation4 + $0x348] sm:$0xff]
    %v198 = vld [vmem:[#allocation4 + $0x350] sm:$0xff]
    %v199 = vld [vmem:[#allocation4 + $0x358] sm:$0xff]
    %v200 = vld [vmem:[#allocation4 + $0x360] sm:$0xff]
    %v201 = vld [vmem:[#allocation4 + $0x368] sm:$0xff]
    %v202 = vld [vmem:[#allocation4 + $0x370] sm:$0xff]
    %v203 = vld [vmem:[#allocation4 + $0x378] sm:$0xff]
    %v204 = vld [vmem:[#allocation4 + $0x380] sm:$0xff]
    %v205 = vld [vmem:[#allocation4 + $0x388] sm:$0xff]
    %v206 = vld [vmem:[#allocation4 + $0x390] sm:$0xff]
    %v207 = vld [vmem:[#allocation4 + $0x398] sm:$0xff]
    %v208 = vld [vmem:[#allocation4 + $0x3a0] sm:$0xff]
    %v209 = vld [vmem:[#allocation4 + $0x3a8] sm:$0xff]
    %v210 = vld [vmem:[#allocation4 + $0x3b0] sm:$0xff]
    %v211 = vld [vmem:[#allocation4 + $0x3b8] sm:$0xff]
    %v212 = vld [vmem:[#allocation4 + $0x3c0] sm:$0xff]
    %v213 = vld [vmem:[#allocation4 + $0x3c8] sm:$0xff]
    %v214 = vld [vmem:[#allocation4 + $0x3d0] sm:$0xff]
    %v215 = vld [vmem:[#allocation4 + $0x3d8] sm:$0xff]
    %v216 = vld [vmem:[#allocation4 + $0x3e0] sm:$0xff]
    %v217 = vld [vmem:[#allocation4 + $0x3e8] sm:$0xff]
    %v218 = vld [vmem:[#allocation4 + $0x3f0] sm:$0xff]
    %v219 = vld [vmem:[#allocation4 + $0x3f8] sm:$0xff]
    %v348 = vunpack.c.l.b16 %v92
    %v349 = vunpack.c.h.b16 %v92
    %v350 = vunpack.c.l.b16 %v93
    %v351 = vunpack.c.h.b16 %v93
    %v352 = vunpack.c.l.b16 %v94
    %v353 = vunpack.c.h.b16 %v94
    %v354 = vunpack.c.l.b16 %v95
    %v355 = vunpack.c.h.b16 %v95
    %v356 = vunpack.c.l.b16 %v96
    %v357 = vunpack.c.h.b16 %v96
    %v358 = vunpack.c.l.b16 %v97
    %v359 = vunpack.c.h.b16 %v97
    %v360 = vunpack.c.l.b16 %v98
    %v361 = vunpack.c.h.b16 %v98
    %v362 = vunpack.c.l.b16 %v99
    %v363 = vunpack.c.h.b16 %v99
    %v364 = vunpack.c.l.b16 %v100
    %v365 = vunpack.c.h.b16 %v100
    %v366 = vunpack.c.l.b16 %v101
    %v367 = vunpack.c.h.b16 %v101
    %v368 = vunpack.c.l.b16 %v102
    %v369 = vunpack.c.h.b16 %v102
    %v370 = vunpack.c.l.b16 %v103
    %v371 = vunpack.c.h.b16 %v103
    %v372 = vunpack.c.l.b16 %v104
    %v373 = vunpack.c.h.b16 %v104
    %v374 = vunpack.c.l.b16 %v105
    %v375 = vunpack.c.h.b16 %v105
    %v376 = vunpack.c.l.b16 %v106
    %v377 = vunpack.c.h.b16 %v106
    %v378 = vunpack.c.l.b16 %v107
    %v379 = vunpack.c.h.b16 %v107
    %v380 = vunpack.c.l.b16 %v108
    %v381 = vunpack.c.h.b16 %v108
    %v382 = vunpack.c.l.b16 %v109
    %v383 = vunpack.c.h.b16 %v109
    %v384 = vunpack.c.l.b16 %v110
    %v385 = vunpack.c.h.b16 %v110
    %v386 = vunpack.c.l.b16 %v111
    %v387 = vunpack.c.h.b16 %v111
    %v388 = vunpack.c.l.b16 %v112
    %v389 = vunpack.c.h.b16 %v112
    %v390 = vunpack.c.l.b16 %v113
    %v391 = vunpack.c.h.b16 %v113
    %v392 = vunpack.c.l.b16 %v114
    %v393 = vunpack.c.h.b16 %v114
    %v394 = vunpack.c.l.b16 %v115
    %v395 = vunpack.c.h.b16 %v115
    %v396 = vunpack.c.l.b16 %v116
    %v397 = vunpack.c.h.b16 %v116
    %v398 = vunpack.c.l.b16 %v117
    %v399 = vunpack.c.h.b16 %v117
    %v400 = vunpack.c.l.b16 %v118
    %v401 = vunpack.c.h.b16 %v118
    %v402 = vunpack.c.l.b16 %v119
    %v403 = vunpack.c.h.b16 %v119
    %v404 = vunpack.c.l.b16 %v120
    %v405 = vunpack.c.h.b16 %v120
    %v406 = vunpack.c.l.b16 %v121
    %v407 = vunpack.c.h.b16 %v121
    %v408 = vunpack.c.l.b16 %v122
    %v409 = vunpack.c.h.b16 %v122
    %v410 = vunpack.c.l.b16 %v123
    %v411 = vunpack.c.h.b16 %v123
    %v412 = vunpack.c.l.b16 %v124
    %v413 = vunpack.c.h.b16 %v124
    %v414 = vunpack.c.l.b16 %v125
    %v415 = vunpack.c.h.b16 %v125
    %v416 = vunpack.c.l.b16 %v126
    %v417 = vunpack.c.h.b16 %v126
    %v418 = vunpack.c.l.b16 %v127
    %v419 = vunpack.c.h.b16 %v127
    %v420 = vunpack.c.l.b16 %v128
    %v421 = vunpack.c.h.b16 %v128
    %v422 = vunpack.c.l.b16 %v129
    %v423 = vunpack.c.h.b16 %v129
    %v424 = vunpack.c.l.b16 %v130
    %v425 = vunpack.c.h.b16 %v130
    %v426 = vunpack.c.l.b16 %v131
    %v427 = vunpack.c.h.b16 %v131
    %v428 = vunpack.c.l.b16 %v132
    %v429 = vunpack.c.h.b16 %v132
    %v430 = vunpack.c.l.b16 %v133
    %v431 = vunpack.c.h.b16 %v133
    %v432 = vunpack.c.l.b16 %v134
    %v433 = vunpack.c.h.b16 %v134
    %v434 = vunpack.c.l.b16 %v135
    %v435 = vunpack.c.h.b16 %v135
    %v436 = vunpack.c.l.b16 %v136
    %v437 = vunpack.c.h.b16 %v136
    %v438 = vunpack.c.l.b16 %v137
    %v439 = vunpack.c.h.b16 %v137
    %v440 = vunpack.c.l.b16 %v138
    %v441 = vunpack.c.h.b16 %v138
    %v442 = vunpack.c.l.b16 %v139
    %v443 = vunpack.c.h.b16 %v139
    %v444 = vunpack.c.l.b16 %v140
    %v445 = vunpack.c.h.b16 %v140
    %v446 = vunpack.c.l.b16 %v141
    %v447 = vunpack.c.h.b16 %v141
    %v448 = vunpack.c.l.b16 %v142
    %v449 = vunpack.c.h.b16 %v142
    %v450 = vunpack.c.l.b16 %v143
    %v451 = vunpack.c.h.b16 %v143
    %v452 = vunpack.c.l.b16 %v144
    %v453 = vunpack.c.h.b16 %v144
    %v454 = vunpack.c.l.b16 %v145
    %v455 = vunpack.c.h.b16 %v145
    %v456 = vunpack.c.l.b16 %v146
    %v457 = vunpack.c.h.b16 %v146
    %v458 = vunpack.c.l.b16 %v147
    %v459 = vunpack.c.h.b16 %v147
    %v460 = vunpack.c.l.b16 %v148
    %v461 = vunpack.c.h.b16 %v148
    %v462 = vunpack.c.l.b16 %v149
    %v463 = vunpack.c.h.b16 %v149
    %v464 = vunpack.c.l.b16 %v150
    %v465 = vunpack.c.h.b16 %v150
    %v466 = vunpack.c.l.b16 %v151
    %v467 = vunpack.c.h.b16 %v151
    %v468 = vunpack.c.l.b16 %v152
    %v469 = vunpack.c.h.b16 %v152
    %v470 = vunpack.c.l.b16 %v153
    %v471 = vunpack.c.h.b16 %v153
    %v472 = vunpack.c.l.b16 %v154
    %v473 = vunpack.c.h.b16 %v154
    %v474 = vunpack.c.l.b16 %v155
    %v475 = vunpack.c.h.b16 %v155
    %v476 = vunpack.c.l.b16 %v156
    %v477 = vunpack.c.h.b16 %v156
    %v478 = vunpack.c.l.b16 %v157
    %v479 = vunpack.c.h.b16 %v157
    %v480 = vunpack.c.l.b16 %v158
    %v481 = vunpack.c.h.b16 %v158
    %v482 = vunpack.c.l.b16 %v159
    %v483 = vunpack.c.h.b16 %v159
    %v484 = vunpack.c.l.b16 %v160
    %v485 = vunpack.c.h.b16 %v160
    %v486 = vunpack.c.l.b16 %v161
    %v487 = vunpack.c.h.b16 %v161
    %v488 = vunpack.c.l.b16 %v162
    %v489 = vunpack.c.h.b16 %v162
    %v490 = vunpack.c.l.b16 %v163
    %v491 = vunpack.c.h.b16 %v163
    %v492 = vunpack.c.l.b16 %v164
    %v493 = vunpack.c.h.b16 %v164
    %v494 = vunpack.c.l.b16 %v165
    %v495 = vunpack.c.h.b16 %v165
    %v496 = vunpack.c.l.b16 %v166
    %v497 = vunpack.c.h.b16 %v166
    %v498 = vunpack.c.l.b16 %v167
    %v499 = vunpack.c.h.b16 %v167
    %v500 = vunpack.c.l.b16 %v168
    %v501 = vunpack.c.h.b16 %v168
    %v502 = vunpack.c.l.b16 %v169
    %v503 = vunpack.c.h.b16 %v169
    %v504 = vunpack.c.l.b16 %v170
    %v505 = vunpack.c.h.b16 %v170
    %v506 = vunpack.c.l.b16 %v171
    %v507 = vunpack.c.h.b16 %v171
    %v508 = vunpack.c.l.b16 %v172
    %v509 = vunpack.c.h.b16 %v172
    %v510 = vunpack.c.l.b16 %v173
    %v511 = vunpack.c.h.b16 %v173
    %v512 = vunpack.c.l.b16 %v174
    %v513 = vunpack.c.h.b16 %v174
    %v514 = vunpack.c.l.b16 %v175
    %v515 = vunpack.c.h.b16 %v175
    %v516 = vunpack.c.l.b16 %v176
    %v517 = vunpack.c.h.b16 %v176
    %v518 = vunpack.c.l.b16 %v177
    %v519 = vunpack.c.h.b16 %v177
    %v520 = vunpack.c.l.b16 %v178
    %v521 = vunpack.c.h.b16 %v178
    %v522 = vunpack.c.l.b16 %v179
    %v523 = vunpack.c.h.b16 %v179
    %v524 = vunpack.c.l.b16 %v180
    %v525 = vunpack.c.h.b16 %v180
    %v526 = vunpack.c.l.b16 %v181
    %v527 = vunpack.c.h.b16 %v181
    %v528 = vunpack.c.l.b16 %v182
    %v529 = vunpack.c.h.b16 %v182
    %v530 = vunpack.c.l.b16 %v183
    %v531 = vunpack.c.h.b16 %v183
    %v532 = vunpack.c.l.b16 %v184
    %v533 = vunpack.c.h.b16 %v184
    %v534 = vunpack.c.l.b16 %v185
    %v535 = vunpack.c.h.b16 %v185
    %v536 = vunpack.c.l.b16 %v186
    %v537 = vunpack.c.h.b16 %v186
    %v538 = vunpack.c.l.b16 %v187
    %v539 = vunpack.c.h.b16 %v187
    %v540 = vunpack.c.l.b16 %v188
    %v541 = vunpack.c.h.b16 %v188
    %v542 = vunpack.c.l.b16 %v189
    %v543 = vunpack.c.h.b16 %v189
    %v544 = vunpack.c.l.b16 %v190
    %v545 = vunpack.c.h.b16 %v190
    %v546 = vunpack.c.l.b16 %v191
    %v547 = vunpack.c.h.b16 %v191
    %v548 = vunpack.c.l.b16 %v192
    %v549 = vunpack.c.h.b16 %v192
    %v550 = vunpack.c.l.b16 %v193
    %v551 = vunpack.c.h.b16 %v193
    %v552 = vunpack.c.l.b16 %v194
    %v553 = vunpack.c.h.b16 %v194
    %v554 = vunpack.c.l.b16 %v195
    %v555 = vunpack.c.h.b16 %v195
    %v556 = vunpack.c.l.b16 %v196
    %v557 = vunpack.c.h.b16 %v196
    %v558 = vunpack.c.l.b16 %v197
    %v559 = vunpack.c.h.b16 %v197
    %v560 = vunpack.c.l.b16 %v198
    %v561 = vunpack.c.h.b16 %v198
    %v562 = vunpack.c.l.b16 %v199
    %v563 = vunpack.c.h.b16 %v199
    %v564 = vunpack.c.l.b16 %v200
    %v565 = vunpack.c.h.b16 %v200
    %v566 = vunpack.c.l.b16 %v201
    %v567 = vunpack.c.h.b16 %v201
    %v568 = vunpack.c.l.b16 %v202
    %v569 = vunpack.c.h.b16 %v202
    %v570 = vunpack.c.l.b16 %v203
    %v571 = vunpack.c.h.b16 %v203
    %v572 = vunpack.c.l.b16 %v204
    %v573 = vunpack.c.h.b16 %v204
    %v574 = vunpack.c.l.b16 %v205
    %v575 = vunpack.c.h.b16 %v205
    %v576 = vunpack.c.l.b16 %v206
    %v577 = vunpack.c.h.b16 %v206
    %v578 = vunpack.c.l.b16 %v207
    %v579 = vunpack.c.h.b16 %v207
    %v580 = vunpack.c.l.b16 %v208
    %v581 = vunpack.c.h.b16 %v208
    %v582 = vunpack.c.l.b16 %v209
    %v583 = vunpack.c.h.b16 %v209
    %v584 = vunpack.c.l.b16 %v210
    %v585 = vunpack.c.h.b16 %v210
    %v586 = vunpack.c.l.b16 %v211
    %v587 = vunpack.c.h.b16 %v211
    %v588 = vunpack.c.l.b16 %v212
    %v589 = vunpack.c.h.b16 %v212
    %v590 = vunpack.c.l.b16 %v213
    %v591 = vunpack.c.h.b16 %v213
    %v592 = vunpack.c.l.b16 %v214
    %v593 = vunpack.c.h.b16 %v214
    %v594 = vunpack.c.l.b16 %v215
    %v595 = vunpack.c.h.b16 %v215
    %v596 = vunpack.c.l.b16 %v216
    %v597 = vunpack.c.h.b16 %v216
    %v598 = vunpack.c.l.b16 %v217
    %v599 = vunpack.c.h.b16 %v217
    %v600 = vunpack.c.l.b16 %v218
    %v601 = vunpack.c.h.b16 %v218
    %v602 = vunpack.c.l.b16 %v219
    %v603 = vunpack.c.h.b16 %v219
    %v604 = vpack.c.b16 %v352, %v348
    %v605 = vpack.c.b16 %v353, %v349
    %v606 = vpack.c.b16 %v354, %v350
    %v607 = vpack.c.b16 %v355, %v351
    %v608 = vpack.c.b16 %v360, %v356
    %v609 = vpack.c.b16 %v361, %v357
    %v610 = vpack.c.b16 %v362, %v358
    %v611 = vpack.c.b16 %v363, %v359
    %v612 = vpack.c.b16 %v368, %v364
    %v613 = vpack.c.b16 %v369, %v365
    %v614 = vpack.c.b16 %v370, %v366
    %v615 = vpack.c.b16 %v371, %v367
    %v616 = vpack.c.b16 %v376, %v372
    %v617 = vpack.c.b16 %v377, %v373
    %v618 = vpack.c.b16 %v378, %v374
    %v619 = vpack.c.b16 %v379, %v375
    %v620 = vpack.c.b16 %v384, %v380
    %v621 = vpack.c.b16 %v385, %v381
    %v622 = vpack.c.b16 %v386, %v382
    %v623 = vpack.c.b16 %v387, %v383
    %v624 = vpack.c.b16 %v392, %v388
    %v625 = vpack.c.b16 %v393, %v389
    %v626 = vpack.c.b16 %v394, %v390
    %v627 = vpack.c.b16 %v395, %v391
    %v628 = vpack.c.b16 %v400, %v396
    %v629 = vpack.c.b16 %v401, %v397
    %v630 = vpack.c.b16 %v402, %v398
    %v631 = vpack.c.b16 %v403, %v399
    %v632 = vpack.c.b16 %v408, %v404
    %v633 = vpack.c.b16 %v409, %v405
    %v634 = vpack.c.b16 %v410, %v406
    %v635 = vpack.c.b16 %v411, %v407
    %v636 = vpack.c.b16 %v416, %v412
    %v637 = vpack.c.b16 %v417, %v413
    %v638 = vpack.c.b16 %v418, %v414
    %v639 = vpack.c.b16 %v419, %v415
    %v640 = vpack.c.b16 %v424, %v420
    %v641 = vpack.c.b16 %v425, %v421
    %v642 = vpack.c.b16 %v426, %v422
    %v643 = vpack.c.b16 %v427, %v423
    %v644 = vpack.c.b16 %v432, %v428
    %v645 = vpack.c.b16 %v433, %v429
    %v646 = vpack.c.b16 %v434, %v430
    %v647 = vpack.c.b16 %v435, %v431
    %v648 = vpack.c.b16 %v440, %v436
    %v649 = vpack.c.b16 %v441, %v437
    %v650 = vpack.c.b16 %v442, %v438
    %v651 = vpack.c.b16 %v443, %v439
    %v652 = vpack.c.b16 %v448, %v444
    %v653 = vpack.c.b16 %v449, %v445
    %v654 = vpack.c.b16 %v450, %v446
    %v655 = vpack.c.b16 %v451, %v447
    %v656 = vpack.c.b16 %v456, %v452
    %v657 = vpack.c.b16 %v457, %v453
    %v658 = vpack.c.b16 %v458, %v454
    %v659 = vpack.c.b16 %v459, %v455
    %v660 = vpack.c.b16 %v464, %v460
    %v661 = vpack.c.b16 %v465, %v461
    %v662 = vpack.c.b16 %v466, %v462
    %v663 = vpack.c.b16 %v467, %v463
    %v664 = vpack.c.b16 %v472, %v468
    %v665 = vpack.c.b16 %v473, %v469
    %v666 = vpack.c.b16 %v474, %v470
    %v667 = vpack.c.b16 %v475, %v471
    %v668 = vpack.c.b16 %v480, %v476
    %v669 = vpack.c.b16 %v481, %v477
    %v670 = vpack.c.b16 %v482, %v478
    %v671 = vpack.c.b16 %v483, %v479
    %v672 = vpack.c.b16 %v488, %v484
    %v673 = vpack.c.b16 %v489, %v485
    %v674 = vpack.c.b16 %v490, %v486
    %v675 = vpack.c.b16 %v491, %v487
    %v676 = vpack.c.b16 %v496, %v492
    %v677 = vpack.c.b16 %v497, %v493
    %v678 = vpack.c.b16 %v498, %v494
    %v679 = vpack.c.b16 %v499, %v495
    %v680 = vpack.c.b16 %v504, %v500
    %v681 = vpack.c.b16 %v505, %v501
    %v682 = vpack.c.b16 %v506, %v502
    %v683 = vpack.c.b16 %v507, %v503
    %v684 = vpack.c.b16 %v512, %v508
    %v685 = vpack.c.b16 %v513, %v509
    %v686 = vpack.c.b16 %v514, %v510
    %v687 = vpack.c.b16 %v515, %v511
    %v688 = vpack.c.b16 %v520, %v516
    %v689 = vpack.c.b16 %v521, %v517
    %v690 = vpack.c.b16 %v522, %v518
    %v691 = vpack.c.b16 %v523, %v519
    %v692 = vpack.c.b16 %v528, %v524
    %v693 = vpack.c.b16 %v529, %v525
    %v694 = vpack.c.b16 %v530, %v526
    %v695 = vpack.c.b16 %v531, %v527
    %v696 = vpack.c.b16 %v536, %v532
    %v697 = vpack.c.b16 %v537, %v533
    %v698 = vpack.c.b16 %v538, %v534
    %v699 = vpack.c.b16 %v539, %v535
    %v700 = vpack.c.b16 %v544, %v540
    %v701 = vpack.c.b16 %v545, %v541
    %v702 = vpack.c.b16 %v546, %v542
    %v703 = vpack.c.b16 %v547, %v543
    %v704 = vpack.c.b16 %v552, %v548
    %v705 = vpack.c.b16 %v553, %v549
    %v706 = vpack.c.b16 %v554, %v550
    %v707 = vpack.c.b16 %v555, %v551
    %v708 = vpack.c.b16 %v560, %v556
    %v709 = vpack.c.b16 %v561, %v557
    %v710 = vpack.c.b16 %v562, %v558
    %v711 = vpack.c.b16 %v563, %v559
    %v712 = vpack.c.b16 %v568, %v564
    %v713 = vpack.c.b16 %v569, %v565
    %v714 = vpack.c.b16 %v570, %v566
    %v715 = vpack.c.b16 %v571, %v567
    %v716 = vpack.c.b16 %v576, %v572
    %v717 = vpack.c.b16 %v577, %v573
    %v718 = vpack.c.b16 %v578, %v574
    %v719 = vpack.c.b16 %v579, %v575
    %v720 = vpack.c.b16 %v584, %v580
    %v721 = vpack.c.b16 %v585, %v581
    %v722 = vpack.c.b16 %v586, %v582
    %v723 = vpack.c.b16 %v587, %v583
    %v724 = vpack.c.b16 %v592, %v588
    %v725 = vpack.c.b16 %v593, %v589
    %v726 = vpack.c.b16 %v594, %v590
    %v727 = vpack.c.b16 %v595, %v591
    %v728 = vpack.c.b16 %v600, %v596
    %v729 = vpack.c.b16 %v601, %v597
    %v730 = vpack.c.b16 %v602, %v598
    %v731 = vpack.c.b16 %v603, %v599
    %860 = vmatpush.bf16.msra.mxu0 %v632
    %861 = vmatpush.bf16.msra.mxu0 %v628
    %862 = vmatpush.bf16.msra.mxu0 %v624
    %863 = vmatpush.bf16.msra.mxu0 %v620
    %864 = vmatpush.bf16.msra.mxu0 %v616
    %865 = vmatpush.bf16.msra.mxu0 %v612
    %866 = vmatpush.bf16.msra.mxu0 %v608
    %867 = vmatpush.bf16.msra.mxu0 %v604
    %868 = vmatmul.bf16.gmra.mxu0 %v88
    %v869 = vpop.f32.mrf.mxu0
    %v870 = vadd.f32 0.0, %v869
    %v871 = vpop.f32.mrf.mxu0
    %v872 = vadd.f32 0.0, %v871
    %873 = vdwg.mxu0
    %874 = vmatpush.bf16.msra.mxu0 %v664
    %875 = vmatpush.bf16.msra.mxu0 %v660
    %876 = vmatpush.bf16.msra.mxu0 %v656
    %877 = vmatpush.bf16.msra.mxu0 %v652
    %878 = vmatpush.bf16.msra.mxu0 %v648
    %879 = vmatpush.bf16.msra.mxu0 %v644
    %880 = vmatpush.bf16.msra.mxu0 %v640
    %881 = vmatpush.bf16.msra.mxu0 %v636
    %882 = vmatmul.bf16.gmra.mxu0 %v89
    %v883 = vpop.f32.mrf.mxu0
    %v884 = vadd.f32 %v870, %v883
    %v885 = vpop.f32.mrf.mxu0
    %v886 = vadd.f32 %v872, %v885
    %887 = vdwg.mxu0
    %888 = vmatpush.bf16.msra.mxu0 %v696
    %889 = vmatpush.bf16.msra.mxu0 %v692
    %890 = vmatpush.bf16.msra.mxu0 %v688
    %891 = vmatpush.bf16.msra.mxu0 %v684
    %892 = vmatpush.bf16.msra.mxu0 %v680
    %893 = vmatpush.bf16.msra.mxu0 %v676
    %894 = vmatpush.bf16.msra.mxu0 %v672
    %895 = vmatpush.bf16.msra.mxu0 %v668
    %896 = vmatmul.bf16.gmra.mxu0 %v90
    %v897 = vpop.f32.mrf.mxu0
    %v898 = vadd.f32 %v884, %v897
    %v899 = vpop.f32.mrf.mxu0
    %v900 = vadd.f32 %v886, %v899
    %901 = vdwg.mxu0
    %902 = vmatpush.bf16.msra.mxu0 %v728
    %903 = vmatpush.bf16.msra.mxu0 %v724
    %904 = vmatpush.bf16.msra.mxu0 %v720
    %905 = vmatpush.bf16.msra.mxu0 %v716
    %906 = vmatpush.bf16.msra.mxu0 %v712
    %907 = vmatpush.bf16.msra.mxu0 %v708
    %908 = vmatpush.bf16.msra.mxu0 %v704
    %909 = vmatpush.bf16.msra.mxu0 %v700
    %910 = vmatmul.bf16.gmra.mxu0 %v91
    %v911 = vpop.f32.mrf.mxu0
    %v912 = vadd.f32 %v898, %v911
    %v913 = vpop.f32.mrf.mxu0
    %v914 = vadd.f32 %v900, %v913
    %915 = vdwg.mxu0
    %916 = vmatpush.bf16.msra.mxu0 %v633
    %917 = vmatpush.bf16.msra.mxu0 %v629
    %918 = vmatpush.bf16.msra.mxu0 %v625
    %919 = vmatpush.bf16.msra.mxu0 %v621
    %920 = vmatpush.bf16.msra.mxu0 %v617
    %921 = vmatpush.bf16.msra.mxu0 %v613
    %922 = vmatpush.bf16.msra.mxu0 %v609
    %923 = vmatpush.bf16.msra.mxu0 %v605
    %924 = vmatmul.bf16.gmra.mxu0 %v88
    %v925 = vpop.f32.mrf.mxu0
    %v926 = vadd.f32 0.0, %v925
    %v927 = vpop.f32.mrf.mxu0
    %v928 = vadd.f32 0.0, %v927
    %929 = vdwg.mxu0
    %930 = vmatpush.bf16.msra.mxu0 %v665
    %931 = vmatpush.bf16.msra.mxu0 %v661
    %932 = vmatpush.bf16.msra.mxu0 %v657
    %933 = vmatpush.bf16.msra.mxu0 %v653
    %934 = vmatpush.bf16.msra.mxu0 %v649
    %935 = vmatpush.bf16.msra.mxu0 %v645
    %936 = vmatpush.bf16.msra.mxu0 %v641
    %937 = vmatpush.bf16.msra.mxu0 %v637
    %938 = vmatmul.bf16.gmra.mxu0 %v89
    %v939 = vpop.f32.mrf.mxu0
    %v940 = vadd.f32 %v926, %v939
    %v941 = vpop.f32.mrf.mxu0
    %v942 = vadd.f32 %v928, %v941
    %943 = vdwg.mxu0
    %944 = vmatpush.bf16.msra.mxu0 %v697
    %945 = vmatpush.bf16.msra.mxu0 %v693
    %946 = vmatpush.bf16.msra.mxu0 %v689
    %947 = vmatpush.bf16.msra.mxu0 %v685
    %948 = vmatpush.bf16.msra.mxu0 %v681
    %949 = vmatpush.bf16.msra.mxu0 %v677
    %950 = vmatpush.bf16.msra.mxu0 %v673
    %951 = vmatpush.bf16.msra.mxu0 %v669
    %952 = vmatmul.bf16.gmra.mxu0 %v90
    %v953 = vpop.f32.mrf.mxu0
    %v954 = vadd.f32 %v940, %v953
    %v955 = vpop.f32.mrf.mxu0
    %v956 = vadd.f32 %v942, %v955
    %957 = vdwg.mxu0
    %958 = vmatpush.bf16.msra.mxu0 %v729
    %959 = vmatpush.bf16.msra.mxu0 %v725
    %960 = vmatpush.bf16.msra.mxu0 %v721
    %961 = vmatpush.bf16.msra.mxu0 %v717
    %962 = vmatpush.bf16.msra.mxu0 %v713
    %963 = vmatpush.bf16.msra.mxu0 %v709
    %964 = vmatpush.bf16.msra.mxu0 %v705
    %965 = vmatpush.bf16.msra.mxu0 %v701
    %966 = vmatmul.bf16.gmra.mxu0 %v91
    %v967 = vpop.f32.mrf.mxu0
    %v968 = vadd.f32 %v954, %v967
    %v969 = vpop.f32.mrf.mxu0
    %v970 = vadd.f32 %v956, %v969
    %971 = vdwg.mxu0
    %972 = vmatpush.bf16.msra.mxu0 %v634
    %973 = vmatpush.bf16.msra.mxu0 %v630
    %974 = vmatpush.bf16.msra.mxu0 %v626
    %975 = vmatpush.bf16.msra.mxu0 %v622
    %976 = vmatpush.bf16.msra.mxu0 %v618
    %977 = vmatpush.bf16.msra.mxu0 %v614
    %978 = vmatpush.bf16.msra.mxu0 %v610
    %979 = vmatpush.bf16.msra.mxu0 %v606
    %980 = vmatmul.bf16.gmra.mxu0 %v88
    %v981 = vpop.f32.mrf.mxu0
    %v982 = vadd.f32 0.0, %v981
    %v983 = vpop.f32.mrf.mxu0
    %v984 = vadd.f32 0.0, %v983
    %985 = vdwg.mxu0
    %986 = vmatpush.bf16.msra.mxu0 %v666
    %987 = vmatpush.bf16.msra.mxu0 %v662
    %988 = vmatpush.bf16.msra.mxu0 %v658
    %989 = vmatpush.bf16.msra.mxu0 %v654
    %990 = vmatpush.bf16.msra.mxu0 %v650
    %991 = vmatpush.bf16.msra.mxu0 %v646
    %992 = vmatpush.bf16.msra.mxu0 %v642
    %993 = vmatpush.bf16.msra.mxu0 %v638
    %994 = vmatmul.bf16.gmra.mxu0 %v89
    %v995 = vpop.f32.mrf.mxu0
    %v996 = vadd.f32 %v982, %v995
    %v997 = vpop.f32.mrf.mxu0
    %v998 = vadd.f32 %v984, %v997
    %999 = vdwg.mxu0
    %1000 = vmatpush.bf16.msra.mxu0 %v698
    %1001 = vmatpush.bf16.msra.mxu0 %v694
    %1002 = vmatpush.bf16.msra.mxu0 %v690
    %1003 = vmatpush.bf16.msra.mxu0 %v686
    %1004 = vmatpush.bf16.msra.mxu0 %v682
    %1005 = vmatpush.bf16.msra.mxu0 %v678
    %1006 = vmatpush.bf16.msra.mxu0 %v674
    %1007 = vmatpush.bf16.msra.mxu0 %v670
    %1008 = vmatmul.bf16.gmra.mxu0 %v90
    %v1009 = vpop.f32.mrf.mxu0
    %v1010 = vadd.f32 %v996, %v1009
    %v1011 = vpop.f32.mrf.mxu0
    %v1012 = vadd.f32 %v998, %v1011
    %1013 = vdwg.mxu0
    %1014 = vmatpush.bf16.msra.mxu0 %v730
    %1015 = vmatpush.bf16.msra.mxu0 %v726
    %1016 = vmatpush.bf16.msra.mxu0 %v722
    %1017 = vmatpush.bf16.msra.mxu0 %v718
    %1018 = vmatpush.bf16.msra.mxu0 %v714
    %1019 = vmatpush.bf16.msra.mxu0 %v710
    %1020 = vmatpush.bf16.msra.mxu0 %v706
    %1021 = vmatpush.bf16.msra.mxu0 %v702
    %1022 = vmatmul.bf16.gmra.mxu0 %v91
    %v1023 = vpop.f32.mrf.mxu0
    %v1024 = vadd.f32 %v1010, %v1023
    %v1025 = vpop.f32.mrf.mxu0
    %v1026 = vadd.f32 %v1012, %v1025
    %1027 = vdwg.mxu0
    %1028 = vmatpush.bf16.msra.mxu0 %v635
    %1029 = vmatpush.bf16.msra.mxu0 %v631
    %1030 = vmatpush.bf16.msra.mxu0 %v627
    %1031 = vmatpush.bf16.msra.mxu0 %v623
    %1032 = vmatpush.bf16.msra.mxu0 %v619
    %1033 = vmatpush.bf16.msra.mxu0 %v615
    %1034 = vmatpush.bf16.msra.mxu0 %v611
    %1035 = vmatpush.bf16.msra.mxu0 %v607
    %1036 = vmatmul.bf16.gmra.mxu0 %v88
    %v1037 = vpop.f32.mrf.mxu0
    %v1038 = vadd.f32 0.0, %v1037
    %v1039 = vpop.f32.mrf.mxu0
    %v1040 = vadd.f32 0.0, %v1039
    %1041 = vdwg.mxu0
    %1042 = vmatpush.bf16.msra.mxu0 %v667
    %1043 = vmatpush.bf16.msra.mxu0 %v663
    %1044 = vmatpush.bf16.msra.mxu0 %v659
    %1045 = vmatpush.bf16.msra.mxu0 %v655
    %1046 = vmatpush.bf16.msra.mxu0 %v651
    %1047 = vmatpush.bf16.msra.mxu0 %v647
    %1048 = vmatpush.bf16.msra.mxu0 %v643
    %1049 = vmatpush.bf16.msra.mxu0 %v639
    %1050 = vmatmul.bf16.gmra.mxu0 %v89
    %v1051 = vpop.f32.mrf.mxu0
    %v1052 = vadd.f32 %v1038, %v1051
    %v1053 = vpop.f32.mrf.mxu0
    %v1054 = vadd.f32 %v1040, %v1053
    %1055 = vdwg.mxu0
    %1056 = vmatpush.bf16.msra.mxu0 %v699
    %1057 = vmatpush.bf16.msra.mxu0 %v695
    %1058 = vmatpush.bf16.msra.mxu0 %v691
    %1059 = vmatpush.bf16.msra.mxu0 %v687
    %1060 = vmatpush.bf16.msra.mxu0 %v683
    %1061 = vmatpush.bf16.msra.mxu0 %v679
    %1062 = vmatpush.bf16.msra.mxu0 %v675
    %1063 = vmatpush.bf16.msra.mxu0 %v671
    %1064 = vmatmul.bf16.gmra.mxu0 %v90
    %v1065 = vpop.f32.mrf.mxu0
    %v1066 = vadd.f32 %v1052, %v1065
    %v1067 = vpop.f32.mrf.mxu0
    %v1068 = vadd.f32 %v1054, %v1067
    %1069 = vdwg.mxu0
    %1070 = vmatpush.bf16.msra.mxu0 %v731
    %1071 = vmatpush.bf16.msra.mxu0 %v727
    %1072 = vmatpush.bf16.msra.mxu0 %v723
    %1073 = vmatpush.bf16.msra.mxu0 %v719
    %1074 = vmatpush.bf16.msra.mxu0 %v715
    %1075 = vmatpush.bf16.msra.mxu0 %v711
    %1076 = vmatpush.bf16.msra.mxu0 %v707
    %1077 = vmatpush.bf16.msra.mxu0 %v703
    %1078 = vmatmul.bf16.gmra.mxu0 %v91
    %v1079 = vpop.f32.mrf.mxu0
    %v1080 = vadd.f32 %v1066, %v1079
    %v1081 = vpop.f32.mrf.mxu0
    %v1082 = vadd.f32 %v1068, %v1081
    %1083 = vdwg.mxu0
    %v1084 = vmax.f32 %v912, 0.0
    %v1085 = vmax.f32 %v968, 0.0
    %v1086 = vmax.f32 %v1024, 0.0
    %v1087 = vmax.f32 %v1080, 0.0
    %v1088 = vmax.f32 %v914, 0.0
    %v1089 = vmax.f32 %v970, 0.0
    %v1090 = vmax.f32 %v1026, 0.0
    %v1091 = vmax.f32 %v1082, 0.0
    %v1092 = vpack.c.bf16 %v1088, %v1084
    %v1093 = vpack.c.bf16 %v1089, %v1085
    %v1094 = vpack.c.bf16 %v1090, %v1086
    %v1095 = vpack.c.bf16 %v1091, %v1087
    %v1096 = vld [vmem:[#allocation6] sm:$0xff]
    %v1097 = vld [vmem:[#allocation6 + $0x8] sm:$0xff]
    %v1098 = vld [vmem:[#allocation6 + $0x10] sm:$0xff]
    %v1099 = vld [vmem:[#allocation6 + $0x18] sm:$0xff]
    %v1100 = vld [vmem:[#allocation6 + $0x20] sm:$0xff]
    %v1101 = vld [vmem:[#allocation6 + $0x28] sm:$0xff]
    %v1102 = vld [vmem:[#allocation6 + $0x30] sm:$0xff]
    %v1103 = vld [vmem:[#allocation6 + $0x38] sm:$0xff]
    %v1104 = vld [vmem:[#allocation6 + $0x40] sm:$0xff]
    %v1105 = vld [vmem:[#allocation6 + $0x48] sm:$0xff]
    %v1106 = vld [vmem:[#allocation6 + $0x50] sm:$0xff]
    %v1107 = vld [vmem:[#allocation6 + $0x58] sm:$0xff]
    %v1108 = vld [vmem:[#allocation6 + $0x60] sm:$0xff]
    %v1109 = vld [vmem:[#allocation6 + $0x68] sm:$0xff]
    %v1110 = vld [vmem:[#allocation6 + $0x70] sm:$0xff]
    %v1111 = vld [vmem:[#allocation6 + $0x78] sm:$0xff]
    %v1112 = vld [vmem:[#allocation6 + $0x80] sm:$0xff]
    %v1113 = vld [vmem:[#allocation6 + $0x88] sm:$0xff]
    %v1114 = vld [vmem:[#allocation6 + $0x90] sm:$0xff]
    %v1115 = vld [vmem:[#allocation6 + $0x98] sm:$0xff]
    %v1116 = vld [vmem:[#allocation6 + $0xa0] sm:$0xff]
    %v1117 = vld [vmem:[#allocation6 + $0xa8] sm:$0xff]
    %v1118 = vld [vmem:[#allocation6 + $0xb0] sm:$0xff]
    %v1119 = vld [vmem:[#allocation6 + $0xb8] sm:$0xff]
    %v1120 = vld [vmem:[#allocation6 + $0xc0] sm:$0xff]
    %v1121 = vld [vmem:[#allocation6 + $0xc8] sm:$0xff]
    %v1122 = vld [vmem:[#allocation6 + $0xd0] sm:$0xff]
    %v1123 = vld [vmem:[#allocation6 + $0xd8] sm:$0xff]
    %v1124 = vld [vmem:[#allocation6 + $0xe0] sm:$0xff]
    %v1125 = vld [vmem:[#allocation6 + $0xe8] sm:$0xff]
    %v1126 = vld [vmem:[#allocation6 + $0xf0] sm:$0xff]
    %v1127 = vld [vmem:[#allocation6 + $0xf8] sm:$0xff]
    %v1128 = vld [vmem:[#allocation6 + $0x100] sm:$0xff]
    %v1129 = vld [vmem:[#allocation6 + $0x108] sm:$0xff]
    %v1130 = vld [vmem:[#allocation6 + $0x110] sm:$0xff]
    %v1131 = vld [vmem:[#allocation6 + $0x118] sm:$0xff]
    %v1132 = vld [vmem:[#allocation6 + $0x120] sm:$0xff]
    %v1133 = vld [vmem:[#allocation6 + $0x128] sm:$0xff]
    %v1134 = vld [vmem:[#allocation6 + $0x130] sm:$0xff]
    %v1135 = vld [vmem:[#allocation6 + $0x138] sm:$0xff]
    %v1136 = vld [vmem:[#allocation6 + $0x140] sm:$0xff]
    %v1137 = vld [vmem:[#allocation6 + $0x148] sm:$0xff]
    %v1138 = vld [vmem:[#allocation6 + $0x150] sm:$0xff]
    %v1139 = vld [vmem:[#allocation6 + $0x158] sm:$0xff]
    %v1140 = vld [vmem:[#allocation6 + $0x160] sm:$0xff]
    %v1141 = vld [vmem:[#allocation6 + $0x168] sm:$0xff]
    %v1142 = vld [vmem:[#allocation6 + $0x170] sm:$0xff]
    %v1143 = vld [vmem:[#allocation6 + $0x178] sm:$0xff]
    %v1144 = vld [vmem:[#allocation6 + $0x180] sm:$0xff]
    %v1145 = vld [vmem:[#allocation6 + $0x188] sm:$0xff]
    %v1146 = vld [vmem:[#allocation6 + $0x190] sm:$0xff]
    %v1147 = vld [vmem:[#allocation6 + $0x198] sm:$0xff]
    %v1148 = vld [vmem:[#allocation6 + $0x1a0] sm:$0xff]
    %v1149 = vld [vmem:[#allocation6 + $0x1a8] sm:$0xff]
    %v1150 = vld [vmem:[#allocation6 + $0x1b0] sm:$0xff]
    %v1151 = vld [vmem:[#allocation6 + $0x1b8] sm:$0xff]
    %v1152 = vld [vmem:[#allocation6 + $0x1c0] sm:$0xff]
    %v1153 = vld [vmem:[#allocation6 + $0x1c8] sm:$0xff]
    %v1154 = vld [vmem:[#allocation6 + $0x1d0] sm:$0xff]
    %v1155 = vld [vmem:[#allocation6 + $0x1d8] sm:$0xff]
    %v1156 = vld [vmem:[#allocation6 + $0x1e0] sm:$0xff]
    %v1157 = vld [vmem:[#allocation6 + $0x1e8] sm:$0xff]
    %v1158 = vld [vmem:[#allocation6 + $0x1f0] sm:$0xff]
    %v1159 = vld [vmem:[#allocation6 + $0x1f8] sm:$0xff]
    %v1224 = vunpack.c.l.b16 %v1096
    %v1225 = vunpack.c.h.b16 %v1096
    %v1226 = vunpack.c.l.b16 %v1097
    %v1227 = vunpack.c.h.b16 %v1097
    %v1228 = vunpack.c.l.b16 %v1098
    %v1229 = vunpack.c.h.b16 %v1098
    %v1230 = vunpack.c.l.b16 %v1099
    %v1231 = vunpack.c.h.b16 %v1099
    %v1232 = vunpack.c.l.b16 %v1100
    %v1233 = vunpack.c.h.b16 %v1100
    %v1234 = vunpack.c.l.b16 %v1101
    %v1235 = vunpack.c.h.b16 %v1101
    %v1236 = vunpack.c.l.b16 %v1102
    %v1237 = vunpack.c.h.b16 %v1102
    %v1238 = vunpack.c.l.b16 %v1103
    %v1239 = vunpack.c.h.b16 %v1103
    %v1240 = vunpack.c.l.b16 %v1104
    %v1241 = vunpack.c.h.b16 %v1104
    %v1242 = vunpack.c.l.b16 %v1105
    %v1243 = vunpack.c.h.b16 %v1105
    %v1244 = vunpack.c.l.b16 %v1106
    %v1245 = vunpack.c.h.b16 %v1106
    %v1246 = vunpack.c.l.b16 %v1107
    %v1247 = vunpack.c.h.b16 %v1107
    %v1248 = vunpack.c.l.b16 %v1108
    %v1249 = vunpack.c.h.b16 %v1108
    %v1250 = vunpack.c.l.b16 %v1109
    %v1251 = vunpack.c.h.b16 %v1109
    %v1252 = vunpack.c.l.b16 %v1110
    %v1253 = vunpack.c.h.b16 %v1110
    %v1254 = vunpack.c.l.b16 %v1111
    %v1255 = vunpack.c.h.b16 %v1111
    %v1256 = vunpack.c.l.b16 %v1112
    %v1257 = vunpack.c.h.b16 %v1112
    %v1258 = vunpack.c.l.b16 %v1113
    %v1259 = vunpack.c.h.b16 %v1113
    %v1260 = vunpack.c.l.b16 %v1114
    %v1261 = vunpack.c.h.b16 %v1114
    %v1262 = vunpack.c.l.b16 %v1115
    %v1263 = vunpack.c.h.b16 %v1115
    %v1264 = vunpack.c.l.b16 %v1116
    %v1265 = vunpack.c.h.b16 %v1116
    %v1266 = vunpack.c.l.b16 %v1117
    %v1267 = vunpack.c.h.b16 %v1117
    %v1268 = vunpack.c.l.b16 %v1118
    %v1269 = vunpack.c.h.b16 %v1118
    %v1270 = vunpack.c.l.b16 %v1119
    %v1271 = vunpack.c.h.b16 %v1119
    %v1272 = vunpack.c.l.b16 %v1120
    %v1273 = vunpack.c.h.b16 %v1120
    %v1274 = vunpack.c.l.b16 %v1121
    %v1275 = vunpack.c.h.b16 %v1121
    %v1276 = vunpack.c.l.b16 %v1122
    %v1277 = vunpack.c.h.b16 %v1122
    %v1278 = vunpack.c.l.b16 %v1123
    %v1279 = vunpack.c.h.b16 %v1123
    %v1280 = vunpack.c.l.b16 %v1124
    %v1281 = vunpack.c.h.b16 %v1124
    %v1282 = vunpack.c.l.b16 %v1125
    %v1283 = vunpack.c.h.b16 %v1125
    %v1284 = vunpack.c.l.b16 %v1126
    %v1285 = vunpack.c.h.b16 %v1126
    %v1286 = vunpack.c.l.b16 %v1127
    %v1287 = vunpack.c.h.b16 %v1127
    %v1288 = vunpack.c.l.b16 %v1128
    %v1289 = vunpack.c.h.b16 %v1128
    %v1290 = vunpack.c.l.b16 %v1129
    %v1291 = vunpack.c.h.b16 %v1129
    %v1292 = vunpack.c.l.b16 %v1130
    %v1293 = vunpack.c.h.b16 %v1130
    %v1294 = vunpack.c.l.b16 %v1131
    %v1295 = vunpack.c.h.b16 %v1131
    %v1296 = vunpack.c.l.b16 %v1132
    %v1297 = vunpack.c.h.b16 %v1132
    %v1298 = vunpack.c.l.b16 %v1133
    %v1299 = vunpack.c.h.b16 %v1133
    %v1300 = vunpack.c.l.b16 %v1134
    %v1301 = vunpack.c.h.b16 %v1134
    %v1302 = vunpack.c.l.b16 %v1135
    %v1303 = vunpack.c.h.b16 %v1135
    %v1304 = vunpack.c.l.b16 %v1136
    %v1305 = vunpack.c.h.b16 %v1136
    %v1306 = vunpack.c.l.b16 %v1137
    %v1307 = vunpack.c.h.b16 %v1137
    %v1308 = vunpack.c.l.b16 %v1138
    %v1309 = vunpack.c.h.b16 %v1138
    %v1310 = vunpack.c.l.b16 %v1139
    %v1311 = vunpack.c.h.b16 %v1139
    %v1312 = vunpack.c.l.b16 %v1140
    %v1313 = vunpack.c.h.b16 %v1140
    %v1314 = vunpack.c.l.b16 %v1141
    %v1315 = vunpack.c.h.b16 %v1141
    %v1316 = vunpack.c.l.b16 %v1142
    %v1317 = vunpack.c.h.b16 %v1142
    %v1318 = vunpack.c.l.b16 %v1143
    %v1319 = vunpack.c.h.b16 %v1143
    %v1320 = vunpack.c.l.b16 %v1144
    %v1321 = vunpack.c.h.b16 %v1144
    %v1322 = vunpack.c.l.b16 %v1145
    %v1323 = vunpack.c.h.b16 %v1145
    %v1324 = vunpack.c.l.b16 %v1146
    %v1325 = vunpack.c.h.b16 %v1146
    %v1326 = vunpack.c.l.b16 %v1147
    %v1327 = vunpack.c.h.b16 %v1147
    %v1328 = vunpack.c.l.b16 %v1148
    %v1329 = vunpack.c.h.b16 %v1148
    %v1330 = vunpack.c.l.b16 %v1149
    %v1331 = vunpack.c.h.b16 %v1149
    %v1332 = vunpack.c.l.b16 %v1150
    %v1333 = vunpack.c.h.b16 %v1150
    %v1334 = vunpack.c.l.b16 %v1151
    %v1335 = vunpack.c.h.b16 %v1151
    %v1336 = vunpack.c.l.b16 %v1152
    %v1337 = vunpack.c.h.b16 %v1152
    %v1338 = vunpack.c.l.b16 %v1153
    %v1339 = vunpack.c.h.b16 %v1153
    %v1340 = vunpack.c.l.b16 %v1154
    %v1341 = vunpack.c.h.b16 %v1154
    %v1342 = vunpack.c.l.b16 %v1155
    %v1343 = vunpack.c.h.b16 %v1155
    %v1344 = vunpack.c.l.b16 %v1156
    %v1345 = vunpack.c.h.b16 %v1156
    %v1346 = vunpack.c.l.b16 %v1157
    %v1347 = vunpack.c.h.b16 %v1157
    %v1348 = vunpack.c.l.b16 %v1158
    %v1349 = vunpack.c.h.b16 %v1158
    %v1350 = vunpack.c.l.b16 %v1159
    %v1351 = vunpack.c.h.b16 %v1159
    %v1352 = vpack.c.b16 %v1226, %v1224
    %v1353 = vpack.c.b16 %v1227, %v1225
    %v1354 = vpack.c.b16 %v1230, %v1228
    %v1355 = vpack.c.b16 %v1231, %v1229
    %v1356 = vpack.c.b16 %v1234, %v1232
    %v1357 = vpack.c.b16 %v1235, %v1233
    %v1358 = vpack.c.b16 %v1238, %v1236
    %v1359 = vpack.c.b16 %v1239, %v1237
    %v1360 = vpack.c.b16 %v1242, %v1240
    %v1361 = vpack.c.b16 %v1243, %v1241
    %v1362 = vpack.c.b16 %v1246, %v1244
    %v1363 = vpack.c.b16 %v1247, %v1245
    %v1364 = vpack.c.b16 %v1250, %v1248
    %v1365 = vpack.c.b16 %v1251, %v1249
    %v1366 = vpack.c.b16 %v1254, %v1252
    %v1367 = vpack.c.b16 %v1255, %v1253
    %v1368 = vpack.c.b16 %v1258, %v1256
    %v1369 = vpack.c.b16 %v1259, %v1257
    %v1370 = vpack.c.b16 %v1262, %v1260
    %v1371 = vpack.c.b16 %v1263, %v1261
    %v1372 = vpack.c.b16 %v1266, %v1264
    %v1373 = vpack.c.b16 %v1267, %v1265
    %v1374 = vpack.c.b16 %v1270, %v1268
    %v1375 = vpack.c.b16 %v1271, %v1269
    %v1376 = vpack.c.b16 %v1274, %v1272
    %v1377 = vpack.c.b16 %v1275, %v1273
    %v1378 = vpack.c.b16 %v1278, %v1276
    %v1379 = vpack.c.b16 %v1279, %v1277
    %v1380 = vpack.c.b16 %v1282, %v1280
    %v1381 = vpack.c.b16 %v1283, %v1281
    %v1382 = vpack.c.b16 %v1286, %v1284
    %v1383 = vpack.c.b16 %v1287, %v1285
    %v1384 = vpack.c.b16 %v1290, %v1288
    %v1385 = vpack.c.b16 %v1291, %v1289
    %v1386 = vpack.c.b16 %v1294, %v1292
    %v1387 = vpack.c.b16 %v1295, %v1293
    %v1388 = vpack.c.b16 %v1298, %v1296
    %v1389 = vpack.c.b16 %v1299, %v1297
    %v1390 = vpack.c.b16 %v1302, %v1300
    %v1391 = vpack.c.b16 %v1303, %v1301
    %v1392 = vpack.c.b16 %v1306, %v1304
    %v1393 = vpack.c.b16 %v1307, %v1305
    %v1394 = vpack.c.b16 %v1310, %v1308
    %v1395 = vpack.c.b16 %v1311, %v1309
    %v1396 = vpack.c.b16 %v1314, %v1312
    %v1397 = vpack.c.b16 %v1315, %v1313
    %v1398 = vpack.c.b16 %v1318, %v1316
    %v1399 = vpack.c.b16 %v1319, %v1317
    %v1400 = vpack.c.b16 %v1322, %v1320
    %v1401 = vpack.c.b16 %v1323, %v1321
    %v1402 = vpack.c.b16 %v1326, %v1324
    %v1403 = vpack.c.b16 %v1327, %v1325
    %v1404 = vpack.c.b16 %v1330, %v1328
    %v1405 = vpack.c.b16 %v1331, %v1329
    %v1406 = vpack.c.b16 %v1334, %v1332
    %v1407 = vpack.c.b16 %v1335, %v1333
    %v1408 = vpack.c.b16 %v1338, %v1336
    %v1409 = vpack.c.b16 %v1339, %v1337
    %v1410 = vpack.c.b16 %v1342, %v1340
    %v1411 = vpack.c.b16 %v1343, %v1341
    %v1412 = vpack.c.b16 %v1346, %v1344
    %v1413 = vpack.c.b16 %v1347, %v1345
    %v1414 = vpack.c.b16 %v1350, %v1348
    %v1415 = vpack.c.b16 %v1351, %v1349
    %1480 = vmatpush.bf16.msra.mxu0 %v1366
    %1481 = vmatpush.bf16.msra.mxu0 %v1364
    %1482 = vmatpush.bf16.msra.mxu0 %v1362
    %1483 = vmatpush.bf16.msra.mxu0 %v1360
    %1484 = vmatpush.bf16.msra.mxu0 %v1358
    %1485 = vmatpush.bf16.msra.mxu0 %v1356
    %1486 = vmatpush.bf16.msra.mxu0 %v1354
    %1487 = vmatpush.bf16.msra.mxu0 %v1352
    %1488 = vmatmul.bf16.gmra.mxu0 %v1092
    %v1489 = vpop.f32.mrf.mxu0
    %v1490 = vadd.f32 0.0, %v1489
    %v1491 = vpop.f32.mrf.mxu0
    %v1492 = vadd.f32 0.0, %v1491
    %1493 = vdwg.mxu0
    %1494 = vmatpush.bf16.msra.mxu0 %v1382
    %1495 = vmatpush.bf16.msra.mxu0 %v1380
    %1496 = vmatpush.bf16.msra.mxu0 %v1378
    %1497 = vmatpush.bf16.msra.mxu0 %v1376
    %1498 = vmatpush.bf16.msra.mxu0 %v1374
    %1499 = vmatpush.bf16.msra.mxu0 %v1372
    %1500 = vmatpush.bf16.msra.mxu0 %v1370
    %1501 = vmatpush.bf16.msra.mxu0 %v1368
    %1502 = vmatmul.bf16.gmra.mxu0 %v1093
    %v1503 = vpop.f32.mrf.mxu0
    %v1504 = vadd.f32 %v1490, %v1503
    %v1505 = vpop.f32.mrf.mxu0
    %v1506 = vadd.f32 %v1492, %v1505
    %1507 = vdwg.mxu0
    %1508 = vmatpush.bf16.msra.mxu0 %v1398
    %1509 = vmatpush.bf16.msra.mxu0 %v1396
    %1510 = vmatpush.bf16.msra.mxu0 %v1394
    %1511 = vmatpush.bf16.msra.mxu0 %v1392
    %1512 = vmatpush.bf16.msra.mxu0 %v1390
    %1513 = vmatpush.bf16.msra.mxu0 %v1388
    %1514 = vmatpush.bf16.msra.mxu0 %v1386
    %1515 = vmatpush.bf16.msra.mxu0 %v1384
    %1516 = vmatmul.bf16.gmra.mxu0 %v1094
    %v1517 = vpop.f32.mrf.mxu0
    %v1518 = vadd.f32 %v1504, %v1517
    %v1519 = vpop.f32.mrf.mxu0
    %v1520 = vadd.f32 %v1506, %v1519
    %1521 = vdwg.mxu0
    %1522 = vmatpush.bf16.msra.mxu0 %v1414
    %1523 = vmatpush.bf16.msra.mxu0 %v1412
    %1524 = vmatpush.bf16.msra.mxu0 %v1410
    %1525 = vmatpush.bf16.msra.mxu0 %v1408
    %1526 = vmatpush.bf16.msra.mxu0 %v1406
    %1527 = vmatpush.bf16.msra.mxu0 %v1404
    %1528 = vmatpush.bf16.msra.mxu0 %v1402
    %1529 = vmatpush.bf16.msra.mxu0 %v1400
    %1530 = vmatmul.bf16.gmra.mxu0 %v1095
    %v1531 = vpop.f32.mrf.mxu0
    %v1532 = vadd.f32 %v1518, %v1531
    %v1533 = vpop.f32.mrf.mxu0
    %v1534 = vadd.f32 %v1520, %v1533
    %1535 = vdwg.mxu0
    %1536 = vmatpush.bf16.msra.mxu0 %v1367
    %1537 = vmatpush.bf16.msra.mxu0 %v1365
    %1538 = vmatpush.bf16.msra.mxu0 %v1363
    %1539 = vmatpush.bf16.msra.mxu0 %v1361
    %1540 = vmatpush.bf16.msra.mxu0 %v1359
    %1541 = vmatpush.bf16.msra.mxu0 %v1357
    %1542 = vmatpush.bf16.msra.mxu0 %v1355
    %1543 = vmatpush.bf16.msra.mxu0 %v1353
    %1544 = vmatmul.bf16.gmra.mxu0 %v1092
    %v1545 = vpop.f32.mrf.mxu0
    %v1546 = vadd.f32 0.0, %v1545
    %v1547 = vpop.f32.mrf.mxu0
    %v1548 = vadd.f32 0.0, %v1547
    %1549 = vdwg.mxu0
    %1550 = vmatpush.bf16.msra.mxu0 %v1383
    %1551 = vmatpush.bf16.msra.mxu0 %v1381
    %1552 = vmatpush.bf16.msra.mxu0 %v1379
    %1553 = vmatpush.bf16.msra.mxu0 %v1377
    %1554 = vmatpush.bf16.msra.mxu0 %v1375
    %1555 = vmatpush.bf16.msra.mxu0 %v1373
    %1556 = vmatpush.bf16.msra.mxu0 %v1371
    %1557 = vmatpush.bf16.msra.mxu0 %v1369
    %1558 = vmatmul.bf16.gmra.mxu0 %v1093
    %v1559 = vpop.f32.mrf.mxu0
    %v1560 = vadd.f32 %v1546, %v1559
    %v1561 = vpop.f32.mrf.mxu0
    %v1562 = vadd.f32 %v1548, %v1561
    %1563 = vdwg.mxu0
    %1564 = vmatpush.bf16.msra.mxu0 %v1399
    %1565 = vmatpush.bf16.msra.mxu0 %v1397
    %1566 = vmatpush.bf16.msra.mxu0 %v1395
    %1567 = vmatpush.bf16.msra.mxu0 %v1393
    %1568 = vmatpush.bf16.msra.mxu0 %v1391
    %1569 = vmatpush.bf16.msra.mxu0 %v1389
    %1570 = vmatpush.bf16.msra.mxu0 %v1387
    %1571 = vmatpush.bf16.msra.mxu0 %v1385
    %1572 = vmatmul.bf16.gmra.mxu0 %v1094
    %v1573 = vpop.f32.mrf.mxu0
    %v1574 = vadd.f32 %v1560, %v1573
    %v1575 = vpop.f32.mrf.mxu0
    %v1576 = vadd.f32 %v1562, %v1575
    %1577 = vdwg.mxu0
    %1578 = vmatpush.bf16.msra.mxu0 %v1415
    %1579 = vmatpush.bf16.msra.mxu0 %v1413
    %1580 = vmatpush.bf16.msra.mxu0 %v1411
    %1581 = vmatpush.bf16.msra.mxu0 %v1409
    %1582 = vmatpush.bf16.msra.mxu0 %v1407
    %1583 = vmatpush.bf16.msra.mxu0 %v1405
    %1584 = vmatpush.bf16.msra.mxu0 %v1403
    %1585 = vmatpush.bf16.msra.mxu0 %v1401
    %1586 = vmatmul.bf16.gmra.mxu0 %v1095
    %v1587 = vpop.f32.mrf.mxu0
    %v1588 = vadd.f32 %v1574, %v1587
    %v1589 = vpop.f32.mrf.mxu0
    %v1590 = vadd.f32 %v1576, %v1589
    %1591 = vdwg.mxu0
    %v1592 = vmax.f32 %v1532, 0.0
    %v1593 = vmax.f32 %v1588, 0.0
    %v1594 = vmax.f32 %v1534, 0.0
    %v1595 = vmax.f32 %v1590, 0.0
    %v1596 = vpack.c.bf16 %v1594, %v1592
    %v1597 = vpack.c.bf16 %v1595, %v1593
    %v1598 = vld [vmem:[#allocation7] sm:$0xf]
    %v1599 = vld [vmem:[#allocation7 + $0x4] sm:$0xf]
    %v1600 = vld [vmem:[#allocation7 + $0x8] sm:$0xf]
    %v1601 = vld [vmem:[#allocation7 + $0xc] sm:$0xf]
    %v1602 = vld [vmem:[#allocation7 + $0x10] sm:$0xf]
    %v1603 = vld [vmem:[#allocation7 + $0x14] sm:$0xf]
    %v1604 = vld [vmem:[#allocation7 + $0x18] sm:$0xf]
    %v1605 = vld [vmem:[#allocation7 + $0x1c] sm:$0xf]
    %v1606 = vld [vmem:[#allocation7 + $0x20] sm:$0xf]
    %v1607 = vld [vmem:[#allocation7 + $0x24] sm:$0xf]
    %v1608 = vld [vmem:[#allocation7 + $0x28] sm:$0xf]
    %v1609 = vld [vmem:[#allocation7 + $0x2c] sm:$0xf]
    %v1610 = vld [vmem:[#allocation7 + $0x30] sm:$0xf]
    %v1611 = vld [vmem:[#allocation7 + $0x34] sm:$0xf]
    %v1612 = vld [vmem:[#allocation7 + $0x38] sm:$0xf]
    %v1613 = vld [vmem:[#allocation7 + $0x3c] sm:$0xf]
    %v1614 = vld [vmem:[#allocation7 + $0x40] sm:$0xf]
    %v1615 = vld [vmem:[#allocation7 + $0x44] sm:$0xf]
    %v1616 = vld [vmem:[#allocation7 + $0x48] sm:$0xf]
    %v1617 = vld [vmem:[#allocation7 + $0x4c] sm:$0xf]
    %v1618 = vld [vmem:[#allocation7 + $0x50] sm:$0xf]
    %v1619 = vld [vmem:[#allocation7 + $0x54] sm:$0xf]
    %v1620 = vld [vmem:[#allocation7 + $0x58] sm:$0xf]
    %v1621 = vld [vmem:[#allocation7 + $0x5c] sm:$0xf]
    %v1622 = vld [vmem:[#allocation7 + $0x60] sm:$0xf]
    %v1623 = vld [vmem:[#allocation7 + $0x64] sm:$0xf]
    %v1624 = vld [vmem:[#allocation7 + $0x68] sm:$0xf]
    %v1625 = vld [vmem:[#allocation7 + $0x6c] sm:$0xf]
    %v1626 = vld [vmem:[#allocation7 + $0x70] sm:$0xf]
    %v1627 = vld [vmem:[#allocation7 + $0x74] sm:$0xf]
    %v1628 = vld [vmem:[#allocation7 + $0x78] sm:$0xf]
    %v1629 = vld [vmem:[#allocation7 + $0x7c] sm:$0xf]
    %v1662 = vunpack.c.l.b16 %v1598
    %v1663 = vunpack.c.l.b16 %v1599
    %v1664 = vunpack.c.l.b16 %v1600
    %v1665 = vunpack.c.l.b16 %v1601
    %v1666 = vunpack.c.l.b16 %v1602
    %v1667 = vunpack.c.l.b16 %v1603
    %v1668 = vunpack.c.l.b16 %v1604
    %v1669 = vunpack.c.l.b16 %v1605
    %v1670 = vunpack.c.l.b16 %v1606
    %v1671 = vunpack.c.l.b16 %v1607
    %v1672 = vunpack.c.l.b16 %v1608
    %v1673 = vunpack.c.l.b16 %v1609
    %v1674 = vunpack.c.l.b16 %v1610
    %v1675 = vunpack.c.l.b16 %v1611
    %v1676 = vunpack.c.l.b16 %v1612
    %v1677 = vunpack.c.l.b16 %v1613
    %v1678 = vunpack.c.l.b16 %v1614
    %v1679 = vunpack.c.l.b16 %v1615
    %v1680 = vunpack.c.l.b16 %v1616
    %v1681 = vunpack.c.l.b16 %v1617
    %v1682 = vunpack.c.l.b16 %v1618
    %v1683 = vunpack.c.l.b16 %v1619
    %v1684 = vunpack.c.l.b16 %v1620
    %v1685 = vunpack.c.l.b16 %v1621
    %v1686 = vunpack.c.l.b16 %v1622
    %v1687 = vunpack.c.l.b16 %v1623
    %v1688 = vunpack.c.l.b16 %v1624
    %v1689 = vunpack.c.l.b16 %v1625
    %v1690 = vunpack.c.l.b16 %v1626
    %v1691 = vunpack.c.l.b16 %v1627
    %v1692 = vunpack.c.l.b16 %v1628
    %v1693 = vunpack.c.l.b16 %v1629
    %v1694 = vpack.c.b16 %v1663, %v1662
    %v1695 = vpack.c.b16 %v1665, %v1664
    %v1696 = vpack.c.b16 %v1667, %v1666
    %v1697 = vpack.c.b16 %v1669, %v1668
    %v1698 = vpack.c.b16 %v1671, %v1670
    %v1699 = vpack.c.b16 %v1673, %v1672
    %v1700 = vpack.c.b16 %v1675, %v1674
    %v1701 = vpack.c.b16 %v1677, %v1676
    %v1702 = vpack.c.b16 %v1679, %v1678
    %v1703 = vpack.c.b16 %v1681, %v1680
    %v1704 = vpack.c.b16 %v1683, %v1682
    %v1705 = vpack.c.b16 %v1685, %v1684
    %v1706 = vpack.c.b16 %v1687, %v1686
    %v1707 = vpack.c.b16 %v1689, %v1688
    %v1708 = vpack.c.b16 %v1691, %v1690
    %v1709 = vpack.c.b16 %v1693, %v1692
    %1726 = vmatpush.bf16.msra.mxu0 %v1701
    %1727 = vmatpush.bf16.msra.mxu0 %v1700
    %1728 = vmatpush.bf16.msra.mxu0 %v1699
    %1729 = vmatpush.bf16.msra.mxu0 %v1698
    %1730 = vmatpush.bf16.msra.mxu0 %v1697
    %1731 = vmatpush.bf16.msra.mxu0 %v1696
    %1732 = vmatpush.bf16.msra.mxu0 %v1695
    %1733 = vmatpush.bf16.msra.mxu0 %v1694
    %1734 = vmatmul.bf16.gmra.mxu0 %v1596
    %v1735 = vpop.f32.mrf.mxu0
    %v1736 = vadd.f32 0.0, %v1735
    %v1737 = vpop.f32.mrf.mxu0
    %v1738 = vadd.f32 0.0, %v1737
    %1739 = vdwg.mxu0
    %1740 = vmatpush.bf16.msra.mxu0 %v1709
    %1741 = vmatpush.bf16.msra.mxu0 %v1708
    %1742 = vmatpush.bf16.msra.mxu0 %v1707
    %1743 = vmatpush.bf16.msra.mxu0 %v1706
    %1744 = vmatpush.bf16.msra.mxu0 %v1705
    %1745 = vmatpush.bf16.msra.mxu0 %v1704
    %1746 = vmatpush.bf16.msra.mxu0 %v1703
    %1747 = vmatpush.bf16.msra.mxu0 %v1702
    %1748 = vmatmul.bf16.gmra.mxu0 %v1597
    %v1749 = vpop.f32.mrf.mxu0
    %v1750 = vadd.f32 %v1736, %v1749
    %v1751 = vpop.f32.mrf.mxu0
    %v1752 = vadd.f32 %v1738, %v1751
    %1753 = vdwg.mxu0
    %v1754 = vpack.c.bf16 %v1750, %v1750
    %v1755 = vpack.c.bf16 %v1752, %v1752
    %1756 = vst [vmem:[%s4] sm:$0xf] %v1754
    %1757 = vst [vmem:[%s4 + $0x4] sm:$0xf] %v1755
    // Predicated region
    $region34: #{emotion_branch.1} parent=1 // pred_check
      _
    $region35: #{emotion_branch.1} parent=1 // pred_check_branch
      %1759 = sbr.rel (0) target = $region37
    $region36: #{emotion_branch.1} parent=1 // pred_region
      _
    $region37: #{emotion_branch.1} parent=1 // pred_fallthru
      _
    // Predicated region
    $region38: #{emotion_branch.1} parent=1 // pred_check
      _
    $region39: #{emotion_branch.1} parent=1 // pred_check_branch
      %1761 = sbr.rel (0) target = $region41
    $region40: #{emotion_branch.1} parent=1 // pred_region
      _
    $region41: #{emotion_branch.1} parent=1 // pred_fallthru
      _
    %1762 = vsyncpa [#allocation3], 1
    %1763 = vsyncpa [#allocation5], 1
    %1764 = vsyncpa [#allocation8], 1

</llo_original>
